<compile_context>
chip_gen: v6e
topology: v6e:2x2x1
jax: 0.10.0
libtpu: 0.0.40
codegen_flags: <defaults>
</compile_context>

<pallas_src>
import functools

import jax
import jax.numpy as jnp
from jax.experimental import pallas as pl
from jax.experimental.pallas import tpu as pltpu


def _distill_kl_kernel(s_ref, t_ref, o_ref, *, inv_temp):
    """Per-row KL(p_t || p_s) for one (TB, C) batch block.

    Writes the per-row KL sum, broadcast across 128 lanes (unmasked vst);
    the wrapper reads column 0 of the first B rows.
    """
    s = s_ref[...].astype(jnp.float32) * inv_temp   # student logits / T
    t = t_ref[...].astype(jnp.float32) * inv_temp   # teacher logits / T

    # Stable log-softmax pieces for the student.
    s_max = jnp.max(s, axis=1, keepdims=True)
    s_shift = s - s_max
    s_lse = jnp.log(jnp.sum(jnp.exp(s_shift), axis=1, keepdims=True))

    # Stable softmax pieces for the teacher.
    t_max = jnp.max(t, axis=1, keepdims=True)
    t_shift = t - t_max
    t_exp = jnp.exp(t_shift)
    t_sum = jnp.sum(t_exp, axis=1, keepdims=True)

    # sum_c p_t * (log p_t - log p_s)
    #   = (1/t_sum) * sum_c t_exp * ((t_shift - s_shift) - (log t_sum - s_lse))
    # One per-row reciprocal instead of C per-element divides; no separate
    # log_p_s / log_p_t / p_t [TB, C] temporaries.
    diff = (t_shift - s_shift) - (jnp.log(t_sum) - s_lse)
    kl_rows = jnp.sum(t_exp * diff, axis=1, keepdims=True)      # [TB, 1]
    kl_rows = kl_rows * pl.reciprocal(t_sum, approx=False)      # exact 1/x

    o_ref[...] = jnp.broadcast_to(kl_rows, o_ref.shape)


def _round_up(x: int, m: int) -> int:
    return (x + m - 1) // m * m


def distill_kl(student_logits, teacher_logits, temperature: float):
    """Pallas TPU implementation of DistillKL.forward."""
    assert student_logits.shape == teacher_logits.shape
    B, C = student_logits.shape
    T = float(temperature)

    # Batch tile: keep each (TB, C) f32 tile around <= 1 MiB so pipeline
    # buffers + intermediates fit the scoped VMEM budget on all generations.
    tile_budget_bytes = 1 << 20
    tb = max(8, min(512, tile_budget_bytes // (4 * C)))
    tb = max(8, (tb // 8) * 8)
    tb = min(tb, _round_up(B, 8))

    b_pad = _round_up(B, tb)
    if b_pad != B:
        pad = b_pad - B
        # Zero-padded rows give identical student/teacher distributions
        # (zero KL contribution); the wrapper also slices them away below.
        student_logits = jnp.pad(student_logits, ((0, pad), (0, 0)))
        teacher_logits = jnp.pad(teacher_logits, ((0, pad), (0, 0)))

    num_blocks = b_pad // tb
    kernel = functools.partial(_distill_kl_kernel, inv_temp=1.0 / T)

    partials = pl.pallas_call(
        kernel,
        out_shape=jax.ShapeDtypeStruct((b_pad, 128), jnp.float32),
        grid=(num_blocks,),
        in_specs=[
            pl.BlockSpec((tb, C), lambda i: (i, 0)),
            pl.BlockSpec((tb, C), lambda i: (i, 0)),
        ],
        out_specs=pl.BlockSpec((tb, 128), lambda i: (i, 0)),
        compiler_params=pltpu.CompilerParams(
            dimension_semantics=("parallel",),
            vmem_limit_bytes=32 * 1024 * 1024,
        ),
    )(student_logits, teacher_logits)

    # Final tiny reduction + T^2 / batch scale in plain JAX.
    return jnp.sum(partials[:B, 0]) * (T * T / B)


def _reference(student_logits, teacher_logits, temperature: float):
    """Pure-JAX reference for correctness check."""
    T = temperature
    log_p_s = jax.nn.log_softmax(student_logits / T, axis=1)
    p_t = jax.nn.softmax(teacher_logits / T, axis=1)
    log_p_t = jax.nn.log_softmax(teacher_logits / T, axis=1)
    loss = jnp.sum(p_t * (log_p_t - log_p_s))
    return loss * (T * T / student_logits.shape[0])


if __name__ == "__main__":
    key = jax.random.PRNGKey(0)
    k1, k2 = jax.random.split(key)

    B, C = 8, 128          # batch, num_classes
    temperature = 4.0      # DistillKL(temperature=4.0)

    student_logits = jax.random.normal(k1, (B, C), dtype=jnp.float32)
    teacher_logits = jax.random.normal(k2, (B, C), dtype=jnp.float32)

    loss = distill_kl(student_logits, teacher_logits, temperature)
    loss = jax.block_until_ready(loss)

    ref = _reference(student_logits, teacher_logits, temperature)
    assert jnp.allclose(loss, ref, rtol=1e-5, atol=1e-6), (loss, ref)

    print("KERNEL_OK")
</pallas_src>

<mosaic_0001>
module attributes {stable_mosaic.version = 11 : i64} {
  func.func @_distill_kl_kernel(%arg0: i32, %arg1: memref<8x128xf32, #tpu.memory_space<vmem>>, %arg2: memref<8x128xf32, #tpu.memory_space<vmem>>, %arg3: memref<8x128xf32, #tpu.memory_space<vmem>>) attributes {dimension_semantics = [#tpu.dimension_semantics<parallel>], iteration_bounds = array<i64: 1>, scalar_prefetch = 0 : i64, scratch_operands = 0 : i64, tpu.core_type = #tpu.core_type<tc>, window_params = [{transform_indices = @transform_0, window_bounds = array<i64: 8, 128>}, {transform_indices = @transform_1, window_bounds = array<i64: 8, 128>}, {transform_indices = @transform_2, window_bounds = array<i64: 8, 128>}]} {
    %c0 = arith.constant 0 : index
    %c0_0 = arith.constant 0 : index
    %0 = vector.load %arg1[%c0, %c0_0] : memref<8x128xf32, #tpu.memory_space<vmem>>, vector<8x128xf32>
    %cst = arith.constant 2.500000e-01 : f32
    %1 = vector.broadcast %cst : f32 to vector<8x128xf32>
    %2 = arith.mulf %0, %1 : vector<8x128xf32>
    %c0_1 = arith.constant 0 : index
    %c0_2 = arith.constant 0 : index
    %3 = vector.load %arg2[%c0_1, %c0_2] : memref<8x128xf32, #tpu.memory_space<vmem>>, vector<8x128xf32>
    %cst_3 = arith.constant 2.500000e-01 : f32
    %4 = vector.broadcast %cst_3 : f32 to vector<8x128xf32>
    %5 = arith.mulf %3, %4 : vector<8x128xf32>
    %cst_4 = arith.constant dense<0xFF800000> : vector<8xf32>
    %6 = vector.multi_reduction <maximumf>, %2, %cst_4 [1] : vector<8x128xf32> to vector<8xf32>
    %7 = vector.shape_cast %6 : vector<8xf32> to vector<8x1xf32>
    %8 = vector.broadcast %7 : vector<8x1xf32> to vector<8x128xf32>
    %9 = arith.subf %2, %8 : vector<8x128xf32>
    %10 = math.exp %9 : vector<8x128xf32>
    %cst_5 = arith.constant dense<0.000000e+00> : vector<8xf32>
    %11 = vector.multi_reduction <add>, %10, %cst_5 [1] : vector<8x128xf32> to vector<8xf32>
    %12 = vector.shape_cast %11 : vector<8xf32> to vector<8x1xf32>
    %13 = math.log %12 : vector<8x1xf32>
    %cst_6 = arith.constant dense<0xFF800000> : vector<8xf32>
    %14 = vector.multi_reduction <maximumf>, %5, %cst_6 [1] : vector<8x128xf32> to vector<8xf32>
    %15 = vector.shape_cast %14 : vector<8xf32> to vector<8x1xf32>
    %16 = vector.broadcast %15 : vector<8x1xf32> to vector<8x128xf32>
    %17 = arith.subf %5, %16 : vector<8x128xf32>
    %18 = math.exp %17 : vector<8x128xf32>
    %cst_7 = arith.constant dense<0.000000e+00> : vector<8xf32>
    %19 = vector.multi_reduction <add>, %18, %cst_7 [1] : vector<8x128xf32> to vector<8xf32>
    %20 = vector.shape_cast %19 : vector<8xf32> to vector<8x1xf32>
    %21 = arith.subf %17, %9 : vector<8x128xf32>
    %22 = math.log %20 : vector<8x1xf32>
    %23 = arith.subf %22, %13 : vector<8x1xf32>
    %24 = vector.broadcast %23 : vector<8x1xf32> to vector<8x128xf32>
    %25 = arith.subf %21, %24 : vector<8x128xf32>
    %26 = arith.mulf %18, %25 : vector<8x128xf32>
    %cst_8 = arith.constant dense<0.000000e+00> : vector<8xf32>
    %27 = vector.multi_reduction <add>, %26, %cst_8 [1] : vector<8x128xf32> to vector<8xf32>
    %28 = vector.shape_cast %27 : vector<8xf32> to vector<8x1xf32>
    %29 = tpu.reciprocal %20 : vector<8x1xf32> -> vector<8x1xf32>
    %30 = arith.mulf %28, %29 : vector<8x1xf32>
    %31 = vector.shape_cast %30 : vector<8x1xf32> to vector<8x1xf32>
    %32 = vector.broadcast %31 : vector<8x1xf32> to vector<8x128xf32>
    %c0_9 = arith.constant 0 : index
    %c0_10 = arith.constant 0 : index
    %33 = vector.load %arg3[%c0_9, %c0_10] : memref<8x128xf32, #tpu.memory_space<vmem>>, vector<8x128xf32>
    tpu.vector_store %arg3[%c0_9, %c0_10], %32 {strides = array<i32>} : memref<8x128xf32, #tpu.memory_space<vmem>>, vector<8x128xf32>,
    return
  }
  func.func @transform_0(%arg0: i32) -> (i32, i32) {
    %c0_i32 = arith.constant 0 : i32
    %c0_i32_0 = arith.constant 0 : i32
    return %arg0, %c0_i32 : i32, i32
  }
  func.func @transform_1(%arg0: i32) -> (i32, i32) {
    %c0_i32 = arith.constant 0 : i32
    %c0_i32_0 = arith.constant 0 : i32
    return %arg0, %c0_i32 : i32, i32
  }
  func.func @transform_2(%arg0: i32) -> (i32, i32) {
    %c0_i32 = arith.constant 0 : i32
    %c0_i32_0 = arith.constant 0 : i32
    return %arg0, %c0_i32 : i32, i32
  }
}

</mosaic_0001>

<llo_original>
// kernel: tpu_custom_call.1
$region0: #{tpu_custom_call.1}
  #allocation0 [shape = 'u32[]', space=smem, size = 0x4, offset = 0x4, fixed_abs, tag = 'smem constant byte address 0x4 - core index']
  #allocation1 [shape = 'u32[144,128]{1,0:T(1,128)}', space=vmem, size = 0x12000, scoped, tag = 'internal scratch']
  %s0 = inlined_call_operand.hbm [shape: f32[8,128], index: 0, kind: input, shape index: {}]
  %s1 = inlined_call_operand.hbm [shape: f32[8,128], index: 1, kind: input, shape index: {}]
  %s2 = inlined_call_operand.hbm [shape: f32[8,128], index: 2, kind: output, shape index: {}]
  %s3 = sld [smem:[#allocation0]]
  $region26: #{tpu_custom_call.1} parent=0
    _
  %s5 = ssub.s32 1, %s3
  %s6 = scalar_select 0, %s5, %s3
  $region1: #{tpu_custom_call.1} parent=0
    #allocation2 [shape = 'u8[4096]{0}', space=vmem, size = 0x1000, scoped, tag = 'input window, operand 0, single buffered']
    #allocation3 [shape = 's32[1]{0}', space=sflag, size = 0x4, scoped, tag = 'scoped memory for tpu_custom_call.1']
    #allocation4 [shape = 's32[1]{0}', space=sflag, size = 0x4, scoped, tag = 'scoped memory for tpu_custom_call.1']
    #allocation5 [shape = 'u8[4096]{0}', space=vmem, size = 0x1000, scoped, tag = 'input window, operand 1, single buffered']
    #allocation6 [shape = 's32[1]{0}', space=sflag, size = 0x4, scoped, tag = 'scoped memory for tpu_custom_call.1']
    #allocation7 [shape = 'u8[4096]{0}', space=vmem, size = 0x1000, scoped, tag = 'output window, operand 0, single buffered']
    %7 = vsyncpa [#allocation3], 0
    %8 = vsyncpa [#allocation6], 0
    %9 = vsyncpa [#allocation4], 0
    // Predicated region
    $region2: #{tpu_custom_call.1} parent=1 // pred_check
      _
    $region3: #{tpu_custom_call.1} parent=1 // pred_check_branch
      %11 = sbr.rel (0) target = $region5
    $region4: #{tpu_custom_call.1} parent=1 // pred_region
      %s13 = ssub.s32 128, 128
      %14 = vsyncadd [#allocation3], %s13
      %s16 = sshll.u32 [#allocation2], 4
      %s17 = int_to_ptr.vmem [resolvable:$true] %s16
      %19 = dma.hbm_to_vmem [thread:$0]  %s0, 128, %s17, [#allocation3]
    $region5: #{tpu_custom_call.1} parent=1 // pred_fallthru
      _
    // Predicated region
    $region6: #{tpu_custom_call.1} parent=1 // pred_check
      _
    $region7: #{tpu_custom_call.1} parent=1 // pred_check_branch
      %21 = sbr.rel (0) target = $region9
    $region8: #{tpu_custom_call.1} parent=1 // pred_region
      %s23 = ssub.s32 128, 128
      %24 = vsyncadd [#allocation6], %s23
      %s26 = sshll.u32 [#allocation5], 4
      %s27 = int_to_ptr.vmem [resolvable:$true] %s26
      %29 = dma.hbm_to_vmem [thread:$0]  %s1, 128, %s27, [#allocation6]
    $region9: #{tpu_custom_call.1} parent=1 // pred_fallthru
      _
    // Predicated region
    $region10: #{tpu_custom_call.1} parent=1 // pred_check
      _
    $region11: #{tpu_custom_call.1} parent=1 // pred_check_branch
      %31 = sbr.rel (0) target = $region13
    $region12: #{tpu_custom_call.1} parent=1 // pred_region
      %32 = dma.done [#allocation3], 128
    $region13: #{tpu_custom_call.1} parent=1 // pred_fallthru
      _
    // Predicated region
    $region14: #{tpu_custom_call.1} parent=1 // pred_check
      _
    $region15: #{tpu_custom_call.1} parent=1 // pred_check_branch
      %34 = sbr.rel (0) target = $region17
    $region16: #{tpu_custom_call.1} parent=1 // pred_region
      %35 = dma.done [#allocation6], 128
    $region17: #{tpu_custom_call.1} parent=1 // pred_fallthru
      _
    %v36 = vld [vmem:[#allocation2] sm:$0xff]
    %v37 = vmul.f32 %v36, 0.25
    %v38 = vld [vmem:[#allocation5] sm:$0xff]
    %v39 = vmul.f32 %v38, 0.25
    %40 = vmax.xlane.f32.xlu0 %v37
    %v41 = vpop.xlane.xlu0 %40
    %v42 = vsub.f32 %v37, %v41
    %v43 = vmul.f32 %v42, 1.442695
    %v44 = vpow.pop %v43
    %45 = vadd.xlane.f32.xlu0 %v44
    %v46 = vpop.xlane.xlu0 %45
    %v47 = vlog2.pop %v46
    %v48 = vmul.f32 %v47, 0.6931472
    %49 = vmax.xlane.f32.xlu0 %v39
    %v50 = vpop.xlane.xlu0 %49
    %v51 = vsub.f32 %v39, %v50
    %v52 = vmul.f32 %v51, 1.442695
    %v53 = vpow.pop %v52
    %54 = vadd.xlane.f32.xlu0 %v53
    %v55 = vpop.xlane.xlu0 %54
    %v56 = vsub.f32 %v51, %v42
    %v57 = vlog2.pop %v55
    %v58 = vmul.f32 %v57, 0.6931472
    %v59 = vsub.f32 %v58, %v48
    %v60 = vsub.f32 %v56, %v59
    %v61 = vmul.f32 %v53, %v60
    %62 = vadd.xlane.f32.xlu0 %v61
    %v63 = vpop.xlane.xlu0 %62
    %v64 = vrcp.pop %v55
    %v65 = vmul.f32 %v63, %v64
    %66 = vst [vmem:[#allocation7] sm:$0xff] %v65
    // Predicated region
    $region18: #{tpu_custom_call.1} parent=1 // pred_check
      _
    $region19: #{tpu_custom_call.1} parent=1 // pred_check_branch
      %68 = sbr.rel (0) target = $region21
    $region20: #{tpu_custom_call.1} parent=1 // pred_region
      %s70 = ssub.s32 128, 128
      %71 = vsyncadd [#allocation4], %s70
      %s73 = sshll.u32 [#allocation7], 4
      %s74 = int_to_ptr.vmem [resolvable:$true] %s73
      %76 = dma.vmem_to_hbm [thread:$0]  %s74, 128, %s2, [#allocation4]
    $region21: #{tpu_custom_call.1} parent=1 // pred_fallthru
      _
    // Predicated region
    $region22: #{tpu_custom_call.1} parent=1 // pred_check
      _
    $region23: #{tpu_custom_call.1} parent=1 // pred_check_branch
      %78 = sbr.rel (0) target = $region25
    $region24: #{tpu_custom_call.1} parent=1 // pred_region
      %79 = dma.done [#allocation4], 128
    $region25: #{tpu_custom_call.1} parent=1 // pred_fallthru
      _
    %80 = vsyncpa [#allocation3], 1
    %81 = vsyncpa [#allocation6], 1
    %82 = vsyncpa [#allocation4], 1

</llo_original>
